<compile_context>
chip_gen: v6e
topology: v6e:2x2x1
jax: 0.10.0
libtpu: 0.0.40
codegen_flags: <defaults>
</compile_context>

<pallas_src>
import functools

import jax
import jax.numpy as jnp
from jax.experimental import pallas as pl
from jax.experimental.pallas import tpu as pltpu

_LANE = 128
_SINGLE_BLOCK_MAX_BYTES = 4 << 20  # ragged sizes up to this run as one block


def _h_sigmoid_kernel(x_ref, o_ref):
    # ReLU6(x + 3) / 6 == clamp(x + 3, 0, 6) * (1/6); compute in f32 (free,
    # kernel is HBM-bandwidth bound) and cast back on store.
    x = x_ref[...].astype(jnp.float32)
    o_ref[...] = (jnp.clip(x + 3.0, 0.0, 6.0) * (1.0 / 6.0)).astype(o_ref.dtype)


@functools.lru_cache(maxsize=None)
def _target_block_bytes():
    """Per-generation block-size target (bytes per buffer)."""
    try:
        info = pltpu.get_tpu_info()
        vmem = getattr(info, "vmem_capacity_bytes", None)
        if vmem is not None and vmem <= (64 << 20):
            # v7x: 64 MiB VMEM, 3.2 TB/s HBM -> bigger tiles to amortize the
            # ~0.35 us per-grid-step overhead.
            return 4 << 20
    except Exception:
        pass
    # v5e / v6e (or unknown): 2 MiB tiles stay inside even v5e's 16 MiB
    # default scoped-VMEM budget with in+out double buffering (4 x 2 MiB).
    return 2 << 20


def _native_sublane(itemsize):
    # f32 -> 8, bf16/f16 -> 16, int8/fp8 -> 32 (sub-32-bit packs along sublanes).
    return max(8, 32 // int(itemsize))


def _choose_block_rows(rows, lanes, itemsize):
    sub = _native_sublane(itemsize)
    if rows <= sub:
        return rows  # block equals the full dim -> always a legal layout
    br = _target_block_bytes() // (lanes * itemsize)
    br = max(sub, (min(br, rows) // sub) * sub)
    # Keep at least 2 grid steps (balanced halves) so v7x can shard the
    # "parallel" axis across both TensorCores. half_aligned < rows when
    # rows > sub, so cdiv(rows, block_rows) >= 2 is guaranteed.
    half_aligned = pl.cdiv(pl.cdiv(rows, 2), sub) * sub
    return min(br, half_aligned)


def _h_sigmoid_2d(x2d):
    """Run the kernel over a 2D slab (rows, lanes). `lanes` must be a multiple
    of 128 or equal to the full last dim of x2d."""
    rows, lanes = x2d.shape
    dtype = x2d.dtype
    itemsize = jnp.dtype(dtype).itemsize
    block_rows = _choose_block_rows(rows, lanes, itemsize)
    n = rows * lanes
    return pl.pallas_call(
        _h_sigmoid_kernel,
        out_shape=jax.ShapeDtypeStruct((rows, lanes), dtype),
        grid=(pl.cdiv(rows, block_rows),),
        in_specs=[pl.BlockSpec((block_rows, lanes), lambda i: (i, 0))],
        out_specs=pl.BlockSpec((block_rows, lanes), lambda i: (i, 0)),
        compiler_params=pltpu.CompilerParams(
            dimension_semantics=("parallel",),
        ),
        cost_estimate=pl.CostEstimate(
            flops=4 * n,
            transcendentals=0,
            bytes_accessed=2 * n * itemsize,
        ),
    )(x2d)


def _widest_lanes(n):
    for cand in (1024, 512, 256):
        if n % cand == 0:
            return cand
    return _LANE


def h_sigmoid(x):
    """Hard-sigmoid relu6(x + 3) / 6, elementwise, any shape/dtype."""
    orig_shape = x.shape
    dtype = x.dtype
    n = x.size
    if n == 0:
        return x
    itemsize = jnp.dtype(dtype).itemsize
    x_flat = jnp.ravel(x)

    # TODO(synk): expose input_output_aliases={0: 0} + buffer donation for the
    # torch `inplace=True` use case (saves an HBM allocation, not bandwidth).

    if n % _LANE == 0:
        # Common case: lane-dense slab, no padding, no extra HBM passes.
        lanes = _widest_lanes(n)
        out = _h_sigmoid_2d(x_flat.reshape(n // lanes, lanes))
        return out.reshape(orig_shape)

    if n * itemsize <= _SINGLE_BLOCK_MAX_BYTES:
        # Small awkward size: one full-array block (legal for any shape),
        # still no padding / copies.
        out = _h_sigmoid_2d(x_flat.reshape(1, n))
        return out.reshape(orig_shape)

    # Large awkward size: kernel over the 128-aligned head; the (<128-element)
    # tail is a tiny jnp expression. No full-array pad/slice passes.
    n_main = (n // _LANE) * _LANE
    head, tail = x_flat[:n_main], x_flat[n_main:]
    lanes = _widest_lanes(n_main)
    head_out = _h_sigmoid_2d(head.reshape(n_main // lanes, lanes)).reshape(-1)
    tail_out = (jnp.clip(tail.astype(jnp.float32) + 3.0, 0.0, 6.0)
                * (1.0 / 6.0)).astype(dtype)
    return jnp.concatenate([head_out, tail_out]).reshape(orig_shape)


def h_sigmoid_ref(x):
    # Pure-JAX reference mirroring torch: relu6(x + 3) / 6 (f32 math).
    return (jnp.clip(x.astype(jnp.float32) + 3.0, 0.0, 6.0) / 6.0).astype(x.dtype)


if __name__ == "__main__":
    key = jax.random.PRNGKey(0)
    k1, k2, k3 = jax.random.split(key, 3)

    # NCHW input, like the PyTorch module would see after a conv.
    x = jax.random.normal(k1, (2, 4, 16, 16), dtype=jnp.float32) * 4.0
    y = jax.block_until_ready(h_sigmoid(x))
    assert y.shape == x.shape and y.dtype == x.dtype
    assert jnp.allclose(y, h_sigmoid_ref(x), atol=1e-6, rtol=1e-6)

    # bf16 input (exercises dtype-aware sublane rounding + f32 in-kernel math).
    xb = (jax.random.normal(k2, (2, 8, 8, 16), dtype=jnp.float32) * 4.0).astype(jnp.bfloat16)
    yb = jax.block_until_ready(h_sigmoid(xb))
    assert yb.shape == xb.shape and yb.dtype == xb.dtype
    assert jnp.allclose(yb.astype(jnp.float32), h_sigmoid_ref(xb).astype(jnp.float32),
                        atol=1e-2, rtol=1e-2)

    # Awkward total size (not a multiple of 128): single full-array-block path,
    # no pad/slice copies.
    xo = jax.random.normal(k3, (3, 5, 7), dtype=jnp.float32) * 4.0
    yo = jax.block_until_ready(h_sigmoid(xo))
    assert yo.shape == xo.shape and yo.dtype == xo.dtype
    assert jnp.allclose(yo, h_sigmoid_ref(xo), atol=1e-6, rtol=1e-6)

    print("KERNEL_OK")
</pallas_src>

<mosaic_0001>
module attributes {stable_mosaic.version = 11 : i64} {
  func.func @_h_sigmoid_kernel(%arg0: i32, %arg1: memref<2x1024xf32, #tpu.memory_space<vmem>>, %arg2: memref<2x1024xf32, #tpu.memory_space<vmem>>) attributes {dimension_semantics = [#tpu.dimension_semantics<parallel>], iteration_bounds = array<i64: 1>, scalar_prefetch = 0 : i64, scratch_operands = 0 : i64, tpu.core_type = #tpu.core_type<tc>, window_params = [{transform_indices = @transform_0, window_bounds = array<i64: 2, 1024>}, {transform_indices = @transform_1, window_bounds = array<i64: 2, 1024>}]} {
    %c0 = arith.constant 0 : index
    %c0_0 = arith.constant 0 : index
    %0 = vector.load %arg1[%c0, %c0_0] : memref<2x1024xf32, #tpu.memory_space<vmem>>, vector<2x1024xf32>
    %cst = arith.constant 3.000000e+00 : f32
    %1 = vector.broadcast %cst : f32 to vector<2x1024xf32>
    %2 = arith.addf %0, %1 : vector<2x1024xf32>
    %cst_1 = arith.constant 0.000000e+00 : f32
    %cst_2 = arith.constant 6.000000e+00 : f32
    %3 = vector.broadcast %cst_1 : f32 to vector<2x1024xf32>
    %4 = arith.maximumf %3, %2 : vector<2x1024xf32>
    %5 = vector.broadcast %cst_2 : f32 to vector<2x1024xf32>
    %6 = arith.minimumf %5, %4 : vector<2x1024xf32>
    %cst_3 = arith.constant 0.166666672 : f32
    %7 = vector.broadcast %cst_3 : f32 to vector<2x1024xf32>
    %8 = arith.mulf %6, %7 : vector<2x1024xf32>
    %c0_4 = arith.constant 0 : index
    %c0_5 = arith.constant 0 : index
    %9 = vector.load %arg2[%c0_4, %c0_5] : memref<2x1024xf32, #tpu.memory_space<vmem>>, vector<2x1024xf32>
    tpu.vector_store %arg2[%c0_4, %c0_5], %8 {strides = array<i32>} : memref<2x1024xf32, #tpu.memory_space<vmem>>, vector<2x1024xf32>,
    return
  }
  func.func @transform_0(%arg0: i32) -> (i32, i32) {
    %c0_i32 = arith.constant 0 : i32
    %c0_i32_0 = arith.constant 0 : i32
    return %arg0, %c0_i32 : i32, i32
  }
  func.func @transform_1(%arg0: i32) -> (i32, i32) {
    %c0_i32 = arith.constant 0 : i32
    %c0_i32_0 = arith.constant 0 : i32
    return %arg0, %c0_i32 : i32, i32
  }
}

</mosaic_0001>

<llo_original>
// kernel: tpu_custom_call.1
$region0: #{tpu_custom_call.1}
  #allocation0 [shape = 'u32[]', space=smem, size = 0x4, offset = 0x4, fixed_abs, tag = 'smem constant byte address 0x4 - core index']
  #allocation1 [shape = 'u32[144,128]{1,0:T(1,128)}', space=vmem, size = 0x12000, scoped, tag = 'internal scratch']
  %s0 = inlined_call_operand.hbm [shape: f32[2,1024], index: 0, kind: input, shape index: {}]
  %s1 = inlined_call_operand.hbm [shape: f32[2,1024], index: 1, kind: output, shape index: {}]
  %s2 = sld [smem:[#allocation0]]
  $region18: #{tpu_custom_call.1} parent=0
    _
  %s4 = ssub.s32 1, %s2
  %s5 = scalar_select 0, %s4, %s2
  $region1: #{tpu_custom_call.1} parent=0
    #allocation2 [shape = 'u8[8192]{0}', space=vmem, size = 0x2000, scoped, tag = 'input window, operand 0, single buffered']
    #allocation3 [shape = 's32[1]{0}', space=sflag, size = 0x4, scoped, tag = 'scoped memory for tpu_custom_call.1']
    #allocation4 [shape = 's32[1]{0}', space=sflag, size = 0x4, scoped, tag = 'scoped memory for tpu_custom_call.1']
    #allocation5 [shape = 'u8[8192]{0}', space=vmem, size = 0x2000, scoped, tag = 'output window, operand 0, single buffered']
    %6 = vsyncpa [#allocation3], 0
    %7 = vsyncpa [#allocation4], 0
    // Predicated region
    $region2: #{tpu_custom_call.1} parent=1 // pred_check
      _
    $region3: #{tpu_custom_call.1} parent=1 // pred_check_branch
      %9 = sbr.rel (0) target = $region5
    $region4: #{tpu_custom_call.1} parent=1 // pred_region
      %s11 = ssub.s32 256, 256
      %12 = vsyncadd [#allocation3], %s11
      %s14 = sshll.u32 [#allocation2], 4
      %s15 = int_to_ptr.vmem [resolvable:$true] %s14
      %17 = dma.hbm_to_vmem [thread:$0]  %s0, 256, %s15, [#allocation3]
    $region5: #{tpu_custom_call.1} parent=1 // pred_fallthru
      _
    // Predicated region
    $region6: #{tpu_custom_call.1} parent=1 // pred_check
      _
    $region7: #{tpu_custom_call.1} parent=1 // pred_check_branch
      %19 = sbr.rel (0) target = $region9
    $region8: #{tpu_custom_call.1} parent=1 // pred_region
      %20 = dma.done [#allocation3], 256
    $region9: #{tpu_custom_call.1} parent=1 // pred_fallthru
      _
    %v21 = vld [vmem:[#allocation2] sm:$0xff]
    %v22 = vld [vmem:[#allocation2 + $0x8] sm:$0xff]
    %v23 = vadd.f32 %v21, 3.0
    %v24 = vadd.f32 %v22, 3.0
    %v25 = vmax.f32 %v23, 0.0
    %v26 = vmax.f32 %v24, 0.0
    %v27 = vmin.f32 %v25, 6.0
    %v28 = vmin.f32 %v26, 6.0
    %v29 = vmul.f32 %v27, 0.16666667
    %v30 = vmul.f32 %v28, 0.16666667
    %31 = vst [vmem:[#allocation5] sm:$0xff] %v29
    %32 = vst [vmem:[#allocation5 + $0x8] sm:$0xff] %v30
    // Predicated region
    $region10: #{tpu_custom_call.1} parent=1 // pred_check
      _
    $region11: #{tpu_custom_call.1} parent=1 // pred_check_branch
      %34 = sbr.rel (0) target = $region13
    $region12: #{tpu_custom_call.1} parent=1 // pred_region
      %s36 = ssub.s32 256, 256
      %37 = vsyncadd [#allocation4], %s36
      %s39 = sshll.u32 [#allocation5], 4
      %s40 = int_to_ptr.vmem [resolvable:$true] %s39
      %42 = dma.vmem_to_hbm [thread:$0]  %s40, 256, %s1, [#allocation4]
    $region13: #{tpu_custom_call.1} parent=1 // pred_fallthru
      _
    // Predicated region
    $region14: #{tpu_custom_call.1} parent=1 // pred_check
      _
    $region15: #{tpu_custom_call.1} parent=1 // pred_check_branch
      %44 = sbr.rel (0) target = $region17
    $region16: #{tpu_custom_call.1} parent=1 // pred_region
      %45 = dma.done [#allocation4], 256
    $region17: #{tpu_custom_call.1} parent=1 // pred_fallthru
      _
    %46 = vsyncpa [#allocation3], 1
    %47 = vsyncpa [#allocation4], 1

</llo_original>
